<compile_context>
chip_gen: v5e
topology: v5e:2x2
jax: 0.10.0
libtpu: 0.0.40
codegen_flags: <defaults>
</compile_context>

<pallas_src>
import functools

import jax
import jax.numpy as jnp
from jax.experimental import pallas as pl
from jax.experimental.pallas import tpu as pltpu

_BN_EPS = 1e-5
_TARGET_COLS = 2048                 # per-grid-step lane width target (1024-2048)
_VMEM_LIMIT = 48 * 1024 * 1024      # scoped-VMEM bump (v5e default is only 16 MiB)


# ---------------------------------------------------------------------------
# Slab-layout geometry helpers
# ---------------------------------------------------------------------------
def _round_up(x, m):
    return (x + m - 1) // m * m


def _geom(h, w):
    """Slab geometry for an (h, w) image: padded plane + per-image guard margins."""
    hp, wp = h + 2, w + 2
    l = hp * wp                       # zero-padded plane length
    g = wp + 1                        # guard = largest |tap shift| = Wp + 1
    lx = _round_up(l + 2 * g, 128)    # per-image slab length, lane-aligned
    return hp, wp, l, g, lx


def _to_slab(x_nchw, lx):
    """[N, C, H, W] -> channel-major slab [C, N*lx] with zero ring + margins."""
    n, c, h, w = x_nchw.shape
    hp, wp = h + 2, w + 2
    g = wp + 1
    xp = jnp.pad(x_nchw, ((0, 0), (0, 0), (1, 1), (1, 1)))       # conv zero ring
    xp = jnp.transpose(xp, (1, 0, 2, 3)).reshape(c, n, hp * wp)
    xp = jnp.pad(xp, ((0, 0), (0, 0), (g, lx - g - hp * wp)))    # guard margins
    return xp.reshape(c, n * lx)


def _slab_to_nchw(a, n, h, w, lx):
    """Channel-major slab [C, N*lx] -> [N, C, H, W] (interior only)."""
    c = a.shape[0]
    hp, wp = h + 2, w + 2
    g = wp + 1
    a = a.reshape(c, n, lx)[:, :, g:g + hp * wp].reshape(c, n, hp, wp)
    a = a[:, :, 1:1 + h, 1:1 + w]
    return jnp.transpose(a, (1, 0, 2, 3))


def _pick_nb(n, lx, target):
    """Images per grid step: ~target lanes, divides N, keeps grid >= 2 when N >= 2."""
    nb = max(1, min(n, target // lx))
    if n >= 2:
        nb = min(nb, max(1, n // 2))         # keep >=2 grid steps (v7x megacore)
    while n % nb:
        nb -= 1
    return nb


def _fold_bn(bn):
    gamma, beta, mean, var = bn
    scale = gamma / jnp.sqrt(var + _BN_EPS)
    bias = beta - mean * scale
    return scale, bias


# ---------------------------------------------------------------------------
# Pallas kernels: fused 3x3 stride-1 conv (+ folded BN) via 9-tap shifted matmul
# ---------------------------------------------------------------------------
def _conv_bn_kernel(x_ref, w_ref, b_ref, m_ref, o_ref, *, wp, g, relu):
    """out = mask * maybe_relu(W_folded @ P + bias), slab layout in and out.

    x_ref: [Cin, BLK] bf16 (streamed)   w_ref: [Cout, 9*Cin] bf16 (resident)
    b_ref: [Cout, 1] f32 (resident)     m_ref: [1, W] f32 interior mask (resident)
    o_ref: [Cout, BLK]
    """
    blk = o_ref.shape[-1]
    width = blk - 2 * g
    taps = [x_ref[:, kh * wp + kw: kh * wp + kw + width]
            for kh in range(3) for kw in range(3)]
    patches = jnp.concatenate(taps, axis=0)               # [9*Cin, W] bf16 (VMEM)
    acc = jnp.dot(w_ref[...], patches, preferred_element_type=jnp.float32)
    acc = acc + b_ref[...]
    if relu:
        acc = jnp.maximum(acc, 0.0)
    acc = acc * m_ref[...]                                 # zero ring + margins
    o_ref[:, g:g + width] = acc.astype(o_ref.dtype)
    # deterministic zero block-edge margins (next conv's padding reads them)
    zeros = jnp.zeros((o_ref.shape[0], g), o_ref.dtype)
    o_ref[:, 0:g] = zeros
    o_ref[:, blk - g:blk] = zeros


def _conv_bn_res_kernel(x_ref, w_ref, b_ref, r_ref, o_ref, *, wp, g, pad_lo, cr):
    """out = relu(W_folded @ P + bias + optionA_zero_pad_channels(residual)).

    r_ref: [Cr, BLK] bf16 shortcut, added into output rows [pad_lo, pad_lo+Cr)
    via row-sliced stores (no zero-concat).
    """
    blk = o_ref.shape[-1]
    width = blk - 2 * g
    cout = o_ref.shape[0]
    taps = [x_ref[:, kh * wp + kw: kh * wp + kw + width]
            for kh in range(3) for kw in range(3)]
    patches = jnp.concatenate(taps, axis=0)
    acc = jnp.dot(w_ref[...], patches, preferred_element_type=jnp.float32)
    acc = acc + b_ref[...]
    r = r_ref[:, g:g + width].astype(jnp.float32)
    lo, hi = pad_lo, pad_lo + cr
    if lo > 0:
        o_ref[0:lo, g:g + width] = jnp.maximum(acc[0:lo], 0.0).astype(o_ref.dtype)
    o_ref[lo:hi, g:g + width] = jnp.maximum(acc[lo:hi] + r, 0.0).astype(o_ref.dtype)
    if hi < cout:
        o_ref[hi:cout, g:g + width] = jnp.maximum(acc[hi:cout], 0.0).astype(o_ref.dtype)


# ---------------------------------------------------------------------------
# Conv wrapper (stride-1, slab layout in -> slab layout out)
# ---------------------------------------------------------------------------
def conv3x3_bn_slab(x_slab, spatial, w_oihw, bn, *, relu=True, residual=None,
                    pad_lo=0, out_dtype=jnp.bfloat16, target_cols=_TARGET_COLS):
    h, w = spatial
    hp, wp, l, g, lx = _geom(h, w)
    cin = x_slab.shape[0]
    cout = w_oihw.shape[0]
    n = x_slab.shape[1] // lx
    assert n * lx == x_slab.shape[1]

    scale, bias = _fold_bn(bn)
    # BN scale folded into the weights (f32 fold, then bf16 cast for the MXU)
    wk = (jnp.transpose(w_oihw, (0, 2, 3, 1)).reshape(cout, 9 * cin)
          * scale[:, None]).astype(jnp.bfloat16)
    bias2 = bias.reshape(cout, 1).astype(jnp.float32)

    nb = _pick_nb(n, lx, target_cols)
    blk = nb * lx
    width = blk - 2 * g
    grid = (n // nb,)

    x_spec = pl.BlockSpec((cin, blk), lambda i: (0, i))        # streamed / pipelined
    w_spec = pl.BlockSpec((cout, 9 * cin), lambda i: (0, 0))   # resident
    b_spec = pl.BlockSpec((cout, 1), lambda i: (0, 0))         # resident
    o_spec = pl.BlockSpec((cout, blk), lambda i: (0, i))       # lane-dense stores
    out_shape = jax.ShapeDtypeStruct((cout, n * lx), out_dtype)
    cparams = pltpu.CompilerParams(dimension_semantics=("parallel",),
                                   vmem_limit_bytes=_VMEM_LIMIT)

    if residual is None:
        # Interior mask (zero the ring + guard margins): the output is then
        # directly the next conv's zero-padded input.  Periodic per slab.
        q = g + jnp.arange(width, dtype=jnp.int32)
        o = (q % lx) - g
        hh, ww = o // wp, o % wp
        interior = ((o >= 0) & (o < l) & (hh >= 1) & (hh <= hp - 2)
                    & (ww >= 1) & (ww <= wp - 2))
        mask = interior.astype(jnp.float32).reshape(1, width)
        m_spec = pl.BlockSpec((1, width), lambda i: (0, 0))    # resident
        kern = functools.partial(_conv_bn_kernel, wp=wp, g=g, relu=relu)
        return pl.pallas_call(
            kern, out_shape=out_shape, grid=grid,
            in_specs=[x_spec, w_spec, b_spec, m_spec], out_specs=o_spec,
            compiler_params=cparams,
        )(x_slab, wk, bias2, mask)

    cr = residual.shape[0]
    assert 0 <= pad_lo and pad_lo + cr <= cout
    r_spec = pl.BlockSpec((cr, blk), lambda i: (0, i))
    kern = functools.partial(_conv_bn_res_kernel, wp=wp, g=g, pad_lo=pad_lo, cr=cr)
    return pl.pallas_call(
        kern, out_shape=out_shape, grid=grid,
        in_specs=[x_spec, w_spec, b_spec, r_spec], out_specs=o_spec,
        compiler_params=cparams,
    )(x_slab, wk, bias2, residual.astype(jnp.bfloat16))


# ---------------------------------------------------------------------------
# BasicBlock forward (matches the PyTorch module semantics, option 'A')
# ---------------------------------------------------------------------------
def basic_block_forward(params, x_nchw):
    """relu(bn1(conv1(x))) -> bn2(conv2(.)) + shortcut(x) -> relu.  NCHW in/out."""
    stride = params["stride"]
    n, cin, h, w = x_nchw.shape
    planes = params["conv1_w"].shape[0]

    _, _, _, _, lx = _geom(h, w)
    x_slab = _to_slab(x_nchw.astype(jnp.float32), lx).astype(jnp.bfloat16)

    # conv1 + bn1 + relu (bf16 channel-major slab output)
    y1 = conv3x3_bn_slab(x_slab, (h, w), params["conv1_w"], params["bn1"],
                         relu=True, out_dtype=jnp.bfloat16)

    if stride == 1 and cin == planes:
        ho, wo = h, w
        y1_slab = y1                          # already conv2's slab layout (bf16)
        r_slab = x_slab                       # identity shortcut, streamed bf16
        pad_lo = 0
        lx2 = lx
    else:
        assert stride == 2 and planes == 2 * cin, "standard option-A downsampling"
        ho, wo = h // 2, w // 2
        _, _, _, _, lx2 = _geom(ho, wo)
        # stride-2 conv == stride-1 conv sampled at even output positions
        y1_ds = _slab_to_nchw(y1, n, h, w, lx)[:, :, ::2, ::2]
        y1_slab = _to_slab(y1_ds, lx2)
        r_slab = _to_slab(x_nchw[:, :, ::2, ::2].astype(jnp.bfloat16), lx2)
        pad_lo = planes // 4                  # option-A channel zero-pad (each side)

    out_slab = conv3x3_bn_slab(y1_slab, (ho, wo), params["conv2_w"], params["bn2"],
                               residual=r_slab, pad_lo=pad_lo,
                               out_dtype=jnp.float32)
    return _slab_to_nchw(out_slab, n, ho, wo, lx2)


# ---------------------------------------------------------------------------
# Pure-JAX reference (mirrors the kernel's bf16-operand numerics)
# ---------------------------------------------------------------------------
def _reference_block(params, x_nchw):
    f32, bf16 = jnp.float32, jnp.bfloat16
    stride = params["stride"]
    cin = x_nchw.shape[1]
    planes = params["conv1_w"].shape[0]

    def conv_bn(x, wgt, bn, s, relu):
        scale, bias = _fold_bn(bn)
        wf = (wgt * scale[:, None, None, None]).astype(bf16).astype(f32)
        xb = x.astype(bf16).astype(f32)
        y = jax.lax.conv_general_dilated(
            xb, wf, (s, s), ((1, 1), (1, 1)),
            dimension_numbers=("NCHW", "OIHW", "NCHW"),
            precision=jax.lax.Precision.HIGHEST)
        y = y + bias[None, :, None, None]
        return jnp.maximum(y, 0.0) if relu else y

    out = conv_bn(x_nchw.astype(f32), params["conv1_w"], params["bn1"], stride, True)
    out = conv_bn(out, params["conv2_w"], params["bn2"], 1, False)
    if stride != 1 or cin != planes:
        pad = planes // 4
        sc = x_nchw[:, :, ::2, ::2].astype(bf16).astype(f32)
        sc = jnp.pad(sc, ((0, 0), (pad, planes - cin - pad), (0, 0), (0, 0)))
    else:
        sc = x_nchw.astype(bf16).astype(f32)
    return jnp.maximum(out + sc, 0.0)


# ---------------------------------------------------------------------------
# Parameter init (mimics PyTorch defaults)
# ---------------------------------------------------------------------------
def _kaiming(key, shape, fan_in):
    return jax.random.normal(key, shape, jnp.float32) * jnp.sqrt(2.0 / fan_in)


def _bn_params(c):
    # BatchNorm2d defaults: gamma=1, beta=0, running_mean=0, running_var=1
    return (jnp.ones((c,), jnp.float32), jnp.zeros((c,), jnp.float32),
            jnp.zeros((c,), jnp.float32), jnp.ones((c,), jnp.float32))


def init_basic_block_params(key, in_planes, planes, stride):
    k1, k2 = jax.random.split(key)
    return {
        "stride": stride,
        "conv1_w": _kaiming(k1, (planes, in_planes, 3, 3), fan_in=in_planes * 9),
        "bn1": _bn_params(planes),
        "conv2_w": _kaiming(k2, (planes, planes, 3, 3), fan_in=planes * 9),
        "bn2": _bn_params(planes),
    }


if __name__ == "__main__":
    key = jax.random.PRNGKey(0)
    kx, kp1, kp2 = jax.random.split(key, 3)

    # small, forward-consistent shapes: batch=2, 16 channels, 16x16 spatial (NCHW)
    x = jax.random.normal(kx, (2, 16, 16, 16), jnp.float32)

    # 1) identity-shortcut block: stride=1, in_planes == planes == 16
    p_id = init_basic_block_params(kp1, in_planes=16, planes=16, stride=1)
    y_id = basic_block_forward(p_id, x)
    jax.block_until_ready(y_id)
    assert y_id.shape == (2, 16, 16, 16)

    # 2) option-A downsampling block: stride=2, 16 -> 32 channels
    p_dn = init_basic_block_params(kp2, in_planes=16, planes=32, stride=2)
    y_dn = basic_block_forward(p_dn, x)
    jax.block_until_ready(y_dn)
    assert y_dn.shape == (2, 32, 8, 8)

    # compare against a pure-JAX reference with matching bf16-operand numerics
    r_id = _reference_block(p_id, x)
    r_dn = _reference_block(p_dn, x)
    err_id = float(jnp.max(jnp.abs(y_id - r_id)))
    err_dn = float(jnp.max(jnp.abs(y_dn - r_dn)))
    assert err_id < 5e-2 and err_dn < 5e-2, (err_id, err_dn)

    # final ReLU => non-negative outputs
    assert bool(jnp.all(y_id >= 0)) and bool(jnp.all(y_dn >= 0))
    print("KERNEL_OK")
</pallas_src>

<mosaic_0001>
module attributes {stable_mosaic.version = 11 : i64} {
  func.func @_conv_bn_kernel(%arg0: i32, %arg1: memref<16x384xbf16, #tpu.memory_space<vmem>>, %arg2: memref<16x144xbf16, #tpu.memory_space<vmem>>, %arg3: memref<16x1xf32, #tpu.memory_space<vmem>>, %arg4: memref<1x346xf32, #tpu.memory_space<vmem>>, %arg5: memref<16x384xbf16, #tpu.memory_space<vmem>>) attributes {dimension_semantics = [#tpu.dimension_semantics<parallel>], iteration_bounds = array<i64: 2>, scalar_prefetch = 0 : i64, scratch_operands = 0 : i64, tpu.core_type = #tpu.core_type<tc>, window_params = [{transform_indices = @transform_0, window_bounds = array<i64: 16, 384>}, {pipeline_mode = #tpu.pipeline_mode<synchronous>, transform_indices = @transform_1, window_bounds = array<i64: 16, 144>}, {pipeline_mode = #tpu.pipeline_mode<synchronous>, transform_indices = @transform_2, window_bounds = array<i64: 16, 1>}, {pipeline_mode = #tpu.pipeline_mode<synchronous>, transform_indices = @transform_3, window_bounds = array<i64: 1, 346>}, {transform_indices = @transform_4, window_bounds = array<i64: 16, 384>}]} {
    %c0 = arith.constant 0 : index
    %c0_0 = arith.constant 0 : index
    %0 = vector.load %arg1[%c0, %c0_0] : memref<16x384xbf16, #tpu.memory_space<vmem>>, vector<16x346xbf16>
    %c0_1 = arith.constant 0 : index
    %c1 = arith.constant 1 : index
    %1 = vector.load %arg1[%c0_1, %c1] : memref<16x384xbf16, #tpu.memory_space<vmem>>, vector<16x346xbf16>
    %c0_2 = arith.constant 0 : index
    %c2 = arith.constant 2 : index
    %2 = vector.load %arg1[%c0_2, %c2] : memref<16x384xbf16, #tpu.memory_space<vmem>>, vector<16x346xbf16>
    %c0_3 = arith.constant 0 : index
    %c18 = arith.constant 18 : index
    %3 = vector.load %arg1[%c0_3, %c18] : memref<16x384xbf16, #tpu.memory_space<vmem>>, vector<16x346xbf16>
    %c0_4 = arith.constant 0 : index
    %c19 = arith.constant 19 : index
    %4 = vector.load %arg1[%c0_4, %c19] : memref<16x384xbf16, #tpu.memory_space<vmem>>, vector<16x346xbf16>
    %c0_5 = arith.constant 0 : index
    %c20 = arith.constant 20 : index
    %5 = vector.load %arg1[%c0_5, %c20] : memref<16x384xbf16, #tpu.memory_space<vmem>>, vector<16x346xbf16>
    %c0_6 = arith.constant 0 : index
    %c36 = arith.constant 36 : index
    %6 = vector.load %arg1[%c0_6, %c36] : memref<16x384xbf16, #tpu.memory_space<vmem>>, vector<16x346xbf16>
    %c0_7 = arith.constant 0 : index
    %c37 = arith.constant 37 : index
    %7 = vector.load %arg1[%c0_7, %c37] : memref<16x384xbf16, #tpu.memory_space<vmem>>, vector<16x346xbf16>
    %c0_8 = arith.constant 0 : index
    %c38 = arith.constant 38 : index
    %8 = vector.load %arg1[%c0_8, %c38] : memref<16x384xbf16, #tpu.memory_space<vmem>>, vector<16x346xbf16>
    %9 = tpu.concatenate %0, %1, %2, %3, %4, %5, %6, %7, %8 in 0 : vector<16x346xbf16>, vector<16x346xbf16>, vector<16x346xbf16>, vector<16x346xbf16>, vector<16x346xbf16>, vector<16x346xbf16>, vector<16x346xbf16>, vector<16x346xbf16>, vector<16x346xbf16> -> vector<144x346xbf16>
    %c0_9 = arith.constant 0 : index
    %c0_10 = arith.constant 0 : index
    %10 = vector.load %arg2[%c0_9, %c0_10] : memref<16x144xbf16, #tpu.memory_space<vmem>>, vector<16x144xbf16>
    %cst = arith.constant dense<0.000000e+00> : vector<16x346xf32>
    %11 = tpu.matmul %10, %9, %cst {dimension_numbers = #tpu.dot_dimension_numbers<[1], [0], [0], [1], [0, 0, 1, 1], [], []>} : vector<16x144xbf16>, vector<144x346xbf16>, vector<16x346xf32> -> vector<16x346xf32>
    %c0_11 = arith.constant 0 : index
    %c0_12 = arith.constant 0 : index
    %12 = vector.load %arg3[%c0_11, %c0_12] : memref<16x1xf32, #tpu.memory_space<vmem>>, vector<16x1xf32>
    %13 = vector.broadcast %12 : vector<16x1xf32> to vector<16x346xf32>
    %14 = arith.addf %11, %13 : vector<16x346xf32>
    %cst_13 = arith.constant 0.000000e+00 : f32
    %15 = vector.broadcast %cst_13 : f32 to vector<16x346xf32>
    %16 = arith.maximumf %14, %15 : vector<16x346xf32>
    %c0_14 = arith.constant 0 : index
    %c0_15 = arith.constant 0 : index
    %17 = vector.load %arg4[%c0_14, %c0_15] : memref<1x346xf32, #tpu.memory_space<vmem>>, vector<1x346xf32>
    %18 = vector.broadcast %17 : vector<1x346xf32> to vector<16x346xf32>
    %19 = arith.mulf %16, %18 : vector<16x346xf32>
    %20 = arith.truncf %19 : vector<16x346xf32> to vector<16x346xbf16>
    %c0_16 = arith.constant 0 : index
    %c19_17 = arith.constant 19 : index
    %21 = vector.load %arg5[%c0_16, %c19_17] : memref<16x384xbf16, #tpu.memory_space<vmem>>, vector<16x346xbf16>
    tpu.vector_store %arg5[%c0_16, %c19_17], %20 {strides = array<i32>} : memref<16x384xbf16, #tpu.memory_space<vmem>>, vector<16x346xbf16>,
    %cst_18 = arith.constant 0.000000e+00 : bf16
    %22 = vector.broadcast %cst_18 : bf16 to vector<16x19xbf16>
    %c0_19 = arith.constant 0 : index
    %c0_20 = arith.constant 0 : index
    %23 = vector.load %arg5[%c0_19, %c0_20] : memref<16x384xbf16, #tpu.memory_space<vmem>>, vector<16x19xbf16>
    tpu.vector_store %arg5[%c0_19, %c0_20], %22 {strides = array<i32>} : memref<16x384xbf16, #tpu.memory_space<vmem>>, vector<16x19xbf16>,
    %c0_21 = arith.constant 0 : index
    %c365 = arith.constant 365 : index
    %24 = vector.load %arg5[%c0_21, %c365] : memref<16x384xbf16, #tpu.memory_space<vmem>>, vector<16x19xbf16>
    tpu.vector_store %arg5[%c0_21, %c365], %22 {strides = array<i32>} : memref<16x384xbf16, #tpu.memory_space<vmem>>, vector<16x19xbf16>,
    return
  }
  func.func @transform_0(%arg0: i32) -> (i32, i32) {
    %c0_i32 = arith.constant 0 : i32
    %c0_i32_0 = arith.constant 0 : i32
    return %c0_i32, %arg0 : i32, i32
  }
  func.func @transform_1(%arg0: i32) -> (i32, i32) {
    %c0_i32 = arith.constant 0 : i32
    %c0_i32_0 = arith.constant 0 : i32
    %c0_i32_1 = arith.constant 0 : i32
    return %c0_i32, %c0_i32_0 : i32, i32
  }
  func.func @transform_2(%arg0: i32) -> (i32, i32) {
    %c0_i32 = arith.constant 0 : i32
    %c0_i32_0 = arith.constant 0 : i32
    %c0_i32_1 = arith.constant 0 : i32
    return %c0_i32, %c0_i32_0 : i32, i32
  }
  func.func @transform_3(%arg0: i32) -> (i32, i32) {
    %c0_i32 = arith.constant 0 : i32
    %c0_i32_0 = arith.constant 0 : i32
    %c0_i32_1 = arith.constant 0 : i32
    return %c0_i32, %c0_i32_0 : i32, i32
  }
  func.func @transform_4(%arg0: i32) -> (i32, i32) {
    %c0_i32 = arith.constant 0 : i32
    %c0_i32_0 = arith.constant 0 : i32
    return %c0_i32, %arg0 : i32, i32
  }
}

</mosaic_0001>

<llo_original>
// kernel: tpu_custom_call.1
$region0: #{tpu_custom_call.1}
  #allocation0 [shape = 'u32[]', space=smem, size = 0x4, offset = 0x4, fixed_abs, tag = 'smem constant byte address 0x4 - core index']
  #allocation1 [shape = 'u32[72,128]{1,0:T(1,128)}', space=vmem, size = 0x9000, scoped, tag = 'internal scratch']
  %s0 = inlined_call_operand.hbm [shape: bf16[16,768], index: 0, kind: input, shape index: {}]
  %s1 = inlined_call_operand.vmem [shape: bf16[16,144], index: 1, kind: input, shape index: {}]
  %s2 = inlined_call_operand.vmem [shape: f32[16,1], index: 2, kind: input, shape index: {}]
  %s3 = inlined_call_operand.hbm [shape: f32[1,346], index: 3, kind: input, shape index: {}]
  %s4 = inlined_call_operand.hbm [shape: bf16[16,768], index: 4, kind: output, shape index: {}]
  %s5 = sld [smem:[#allocation0]]
  $region57: #{tpu_custom_call.1} parent=0
    _
  %s7 = ssub.s32 1, %s5
  %s8 = scalar_select 0, %s7, %s5
  $region1: #{tpu_custom_call.1} parent=0
    #allocation2 [shape = 'u8[24576]{0}', space=vmem, size = 0x6000, scoped, tag = 'input window, operand 0']
    #allocation3 [shape = 's32[2]{0}', space=sflag, size = 0x8, scoped, tag = 'scoped memory for tpu_custom_call.1']
    #allocation4 [shape = 's32[2]{0}', space=sflag, size = 0x8, scoped, tag = 'scoped memory for tpu_custom_call.1']
    #allocation5 [shape = 'u8[1536]{0}', space=vmem, size = 0x800, scoped, tag = 'input window, operand 3, single buffered']
    #allocation6 [shape = 's32[1]{0}', space=sflag, size = 0x4, scoped, tag = 'scoped memory for tpu_custom_call.1']
    #allocation7 [shape = 'u8[24576]{0}', space=vmem, size = 0x6000, scoped, tag = 'output window, operand 0']
    %9 = vsyncpa [#allocation3], 0
    %s10 = scalar_lea.sflag [#allocation3], 1
    %11 = vsyncpa %s10, 0
    %12 = vsyncpa [#allocation6], 0
    %13 = vsyncpa [#allocation4], 0
    %s14 = scalar_lea.sflag [#allocation4], 1
    %15 = vsyncpa %s14, 0
    loop: start=0, step=1, limit=4
    $region2: #{tpu_custom_call.1} parent=1 // loop_pre_header
      _
    $region3: #{tpu_custom_call.1} parent=1 // loop_header
      %s17 = sphi 0, %s21
      %p18 = scmp.ge.s32.totalorder %s17, 4
      %s27 = sphi 0, %s29
      %s30 = sphi 0, %s27
      %s31 = sphi 0, %s30
      %s47 = sphi 0, %s31
      %s51 = sphi 0, %s51
      %s53 = sphi 0, %s51
      %s54 = sphi 0, %s53
      %s68 = sphi 0, %s54
      %s72 = sphi 0, %s72
      %s74 = sphi 0, %s72
      %s75 = sphi 0, %s74
      %s89 = sphi 0, %s75
      %s93 = sphi 0, %s93
      %s95 = sphi 0, %s93
      %s96 = sphi 0, %s95
      %s110 = sphi 0, %s96
      %s116 = sphi 0, %s118
      %s119 = sphi 0, %s116
      %s120 = sphi 0, %s119
      %s136 = sphi 0, %s120
    $region4: #{tpu_custom_call.1} parent=1 // loop_header_branch
      %20 = sbr.rel (%p18) target = $region8
    $region5: #{tpu_custom_call.1} parent=1 // loop_body
      %s22 = ssub.s32 %s17, 1
      %s23 = ssub.s32 %s17, 2
      %s24 = sadd.s32 %s17, 1
      %s25 = ssub.s32 %s17, %s24
      %p26 = scmp.eq.s32.totalorder %s25, 0
      %s28 = sadd.s32 %s27, 1
      %s29 = scalar_select %p26, %s27, %s28
      %p32 = pneg %p26
      %p33 = scmp.eq.s32.totalorder %s17, 1
      %p34 = por %p32, %p33
      %p35 = scmp.ne.s32.totalorder %s27, %s30
      %p36 = scmp.eq.s32.totalorder %s17, 0
      %p37 = por %p35, %p36
      %p38 = scmp.ne.s32.totalorder %s27, %s30
      %p39 = scmp.eq.s32.totalorder %s22, 1
      %p40 = por %p38, %p39
      %p41 = scmp.ne.s32.totalorder %s30, %s31
      %p42 = scmp.eq.s32.totalorder %s22, 0
      %p43 = por %p41, %p42
      %p44 = scmp.ne.s32.totalorder %s30, %s31
      %p45 = scmp.eq.s32.totalorder %s23, 1
      %p46 = por %p44, %p45
      %p48 = scmp.ne.s32.totalorder %s31, %s47
      %p49 = scmp.eq.s32.totalorder %s23, 0
      %p50 = por %p48, %p49
      %s52 = sadd.s32 %s51, 1
      %p55 = scmp.eq.s32.totalorder %s17, 1
      %p56 = scmp.ne.s32.totalorder %s51, %s53
      %p57 = scmp.eq.s32.totalorder %s17, 0
      %p58 = por %p56, %p57
      %p59 = scmp.ne.s32.totalorder %s51, %s53
      %p60 = scmp.eq.s32.totalorder %s22, 1
      %p61 = por %p59, %p60
      %p62 = scmp.ne.s32.totalorder %s53, %s54
      %p63 = scmp.eq.s32.totalorder %s22, 0
      %p64 = por %p62, %p63
      %p65 = scmp.ne.s32.totalorder %s53, %s54
      %p66 = scmp.eq.s32.totalorder %s23, 1
      %p67 = por %p65, %p66
      %p69 = scmp.ne.s32.totalorder %s54, %s68
      %p70 = scmp.eq.s32.totalorder %s23, 0
      %p71 = por %p69, %p70
      %s73 = sadd.s32 %s72, 1
      %p76 = scmp.eq.s32.totalorder %s17, 1
      %p77 = scmp.ne.s32.totalorder %s72, %s74
      %p78 = scmp.eq.s32.totalorder %s17, 0
      %p79 = por %p77, %p78
      %p80 = scmp.ne.s32.totalorder %s72, %s74
      %p81 = scmp.eq.s32.totalorder %s22, 1
      %p82 = por %p80, %p81
      %p83 = scmp.ne.s32.totalorder %s74, %s75
      %p84 = scmp.eq.s32.totalorder %s22, 0
      %p85 = por %p83, %p84
      %p86 = scmp.ne.s32.totalorder %s74, %s75
      %p87 = scmp.eq.s32.totalorder %s23, 1
      %p88 = por %p86, %p87
      %p90 = scmp.ne.s32.totalorder %s75, %s89
      %p91 = scmp.eq.s32.totalorder %s23, 0
      %p92 = por %p90, %p91
      %s94 = sadd.s32 %s93, 1
      %p97 = scmp.eq.s32.totalorder %s17, 1
      %p98 = scmp.ne.s32.totalorder %s93, %s95
      %p99 = scmp.eq.s32.totalorder %s17, 0
      %p100 = por %p98, %p99
      %p101 = scmp.ne.s32.totalorder %s93, %s95
      %p102 = scmp.eq.s32.totalorder %s22, 1
      %p103 = por %p101, %p102
      %p104 = scmp.ne.s32.totalorder %s95, %s96
      %p105 = scmp.eq.s32.totalorder %s22, 0
      %p106 = por %p104, %p105
      %p107 = scmp.ne.s32.totalorder %s95, %s96
      %p108 = scmp.eq.s32.totalorder %s23, 1
      %p109 = por %p107, %p108
      %p111 = scmp.ne.s32.totalorder %s96, %s110
      %p112 = scmp.eq.s32.totalorder %s23, 0
      %p113 = por %p111, %p112
      %s114 = ssub.s32 %s17, %s24
      %p115 = scmp.eq.s32.totalorder %s114, 0
      %s117 = sadd.s32 %s116, 1
      %s118 = scalar_select %p115, %s116, %s117
      %p121 = pneg %p115
      %p122 = scmp.eq.s32.totalorder %s17, 1
      %p123 = por %p121, %p122
      %p124 = scmp.ne.s32.totalorder %s116, %s119
      %p125 = scmp.eq.s32.totalorder %s17, 0
      %p126 = por %p124, %p125
      %p127 = scmp.ne.s32.totalorder %s116, %s119
      %p128 = scmp.eq.s32.totalorder %s22, 1
      %p129 = por %p127, %p128
      %p130 = scmp.ne.s32.totalorder %s119, %s120
      %p131 = scmp.eq.s32.totalorder %s22, 0
      %p132 = por %p130, %p131
      %p133 = scmp.ne.s32.totalorder %s119, %s120
      %p134 = scmp.eq.s32.totalorder %s23, 1
      %p135 = por %p133, %p134
      %p137 = scmp.ne.s32.totalorder %s120, %s136
      %p138 = scmp.eq.s32.totalorder %s23, 0
      %p139 = por %p137, %p138
      %p140 = scmp.le.s32.totalorder 1, %s17
      %p141 = scmp.lt.s32.totalorder %s17, 3
      %p142 = pnand %p140, %p141
      %p143 = pneg %p142
      // Predicated region
      $region9: #{tpu_custom_call.1} parent=5 // pred_check
        _
      $region10: #{tpu_custom_call.1} parent=5 // pred_check_branch
        %145 = sbr.rel (%p142) target = $region12
      $region11: #{tpu_custom_call.1} parent=5 // pred_region
        %s146 = ssub.s32 %s17, 1
        // Predicated region
        $region13: #{tpu_custom_call.1} parent=11 // pred_check
          %p147 = pneg %p64
        $region14: #{tpu_custom_call.1} parent=11 // pred_check_branch
          %149 = sbr.rel (%p147) target = $region16
        $region15: #{tpu_custom_call.1} parent=11 // pred_region
          _
        $region16: #{tpu_custom_call.1} parent=11 // pred_fallthru
          _
        // Predicated region
        $region17: #{tpu_custom_call.1} parent=11 // pred_check
          %p150 = pneg %p85
        $region18: #{tpu_custom_call.1} parent=11 // pred_check_branch
          %152 = sbr.rel (%p150) target = $region20
        $region19: #{tpu_custom_call.1} parent=11 // pred_region
          _
        $region20: #{tpu_custom_call.1} parent=11 // pred_fallthru
          _
        // Predicated region
        $region21: #{tpu_custom_call.1} parent=11 // pred_check
          %p153 = pneg %p106
        $region22: #{tpu_custom_call.1} parent=11 // pred_check_branch
          %155 = sbr.rel (%p153) target = $region24
        $region23: #{tpu_custom_call.1} parent=11 // pred_region
          %157 = vsyncadd [#allocation6], 0
          %s159 = sshll.u32 %s3, 4
          %s160 = int_to_ptr.hbm [resolvable:$true] %s159
          %s161 = sshll.u32 [#allocation5], 4
          %s162 = int_to_ptr.vmem [resolvable:$true] %s161
          %164 = dma.hbm_to_vmem [thread:$0]  %s160, 48, %s162, [#allocation6]
        $region24: #{tpu_custom_call.1} parent=11 // pred_fallthru
          _
      $region12: #{tpu_custom_call.1} parent=5 // pred_fallthru
        _
      %p165 = scmp.lt.s32.totalorder %s17, 2
      // Predicated region
      $region25: #{tpu_custom_call.1} parent=5 // pred_check
        %p166 = pneg %p165
      $region26: #{tpu_custom_call.1} parent=5 // pred_check_branch
        %168 = sbr.rel (%p166) target = $region28
      $region27: #{tpu_custom_call.1} parent=5 // pred_region
        // Predicated region
        $region29: #{tpu_custom_call.1} parent=27 // pred_check
          %p169 = pneg %p37
        $region30: #{tpu_custom_call.1} parent=27 // pred_check_branch
          %171 = sbr.rel (%p169) target = $region32
        $region31: #{tpu_custom_call.1} parent=27 // pred_region
          %s172 = sand.u32 %s27, 1
          %s173 = scalar_lea.sflag [#allocation3], %s172
          %s174 = sand.u32 %s27, 1
          %s175 = smul.addr %s174, 24
          %s176 = scalar_lea.vmem [#allocation2], %s175
          %s177 = smul.u32 3, %s17
          %179 = vsyncadd %s173, 0
          %s180 = smul.addr %s177, 4
          %s181 = scalar_lea.hbm %s0, %s180
          %s182 = sshll.u32 %s181, 4
          %s183 = int_to_ptr.hbm [resolvable:$true] %s182
          %s184 = sshll.u32 %s176, 4
          %s185 = int_to_ptr.vmem [resolvable:$true] %s184
          %190 = dma.hbm_to_vmem [thread:$0]  %s183, 384, %s185, %s173, 384, 192, 12
        $region32: #{tpu_custom_call.1} parent=27 // pred_fallthru
          _
      $region28: #{tpu_custom_call.1} parent=5 // pred_fallthru
        _
      %p191 = scmp.le.s32.totalorder 1, %s17
      %p192 = scmp.lt.s32.totalorder %s17, 3
      %p193 = pnand %p191, %p192
      %p194 = pneg %p193
      // Predicated region
      $region33: #{tpu_custom_call.1} parent=5 // pred_check
        _
      $region34: #{tpu_custom_call.1} parent=5 // pred_check_branch
        %196 = sbr.rel (%p193) target = $region36
      $region35: #{tpu_custom_call.1} parent=5 // pred_region
        %s197 = ssub.s32 %s17, 1
        %s198 = sand.u32 %s30, 1
        %s199 = scalar_lea.sflag [#allocation3], %s198
        %s200 = sand.u32 %s30, 1
        %s201 = smul.addr %s200, 24
        %s202 = scalar_lea.vmem [#allocation2], %s201
        // Predicated region
        $region37: #{tpu_custom_call.1} parent=35 // pred_check
          %p203 = pneg %p43
        $region38: #{tpu_custom_call.1} parent=35 // pred_check_branch
          %205 = sbr.rel (%p203) target = $region40
        $region39: #{tpu_custom_call.1} parent=35 // pred_region
          %207 = dma.done %s199, 384
        $region40: #{tpu_custom_call.1} parent=35 // pred_fallthru
          _
        // Predicated region
        $region41: #{tpu_custom_call.1} parent=35 // pred_check
          %p208 = pneg %p106
        $region42: #{tpu_custom_call.1} parent=35 // pred_check_branch
          %210 = sbr.rel (%p208) target = $region44
        $region43: #{tpu_custom_call.1} parent=35 // pred_region
          %212 = dma.done [#allocation6], 48
        $region44: #{tpu_custom_call.1} parent=35 // pred_fallthru
          _
        %s213 = sand.u32 %s30, 1
        %s214 = scalar_lea.sflag [#allocation3], %s213
        %s215 = sand.u32 %s30, 1
        %s216 = smul.addr %s215, 24
        %s217 = scalar_lea.vmem [#allocation2], %s216
        %p218 = pneg %p43
        %p219 = pneg %p40
        %p220 = pneg %p64
        %p221 = pneg %p61
        %p222 = pneg %p85
        %p223 = pneg %p82
        %p224 = pneg %p106
        %p225 = pneg %p103
        %p226 = pneg %p132
        %p227 = pneg %p129
        %s228 = sand.u32 %s119, 1
        %s229 = scalar_lea.sflag [#allocation4], %s228
        %s230 = sand.u32 %s119, 1
        %s231 = smul.addr %s230, 24
        %s232 = scalar_lea.vmem [#allocation7], %s231
        %s233 = smul.u32 3, %s22
        %s234 = smul.u32 3, %s22
        %v236 = vld [vmem:[%s202] sm:$0xff]
        %v237 = vld [vmem:[%s202 + $0x8] sm:$0xf]
        %v238 = vld [vmem:[%s202 + $0xc] sm:$0xff]
        %v239 = vld [vmem:[%s202 + $0x14] sm:$0xf]
        %v244 = vunpack.c.l.b16 %v236
        %v245 = vunpack.c.h.b16 %v236
        %v246 = vunpack.c.l.b16 %v237
        %v247 = vunpack.c.l.b16 %v238
        %v248 = vunpack.c.h.b16 %v238
        %v249 = vunpack.c.l.b16 %v239
        %v250 = vpack.c.b16 %v247, %v244
        %v251 = vpack.c.b16 %v248, %v245
        %v252 = vpack.c.b16 %v249, %v246
        %256 = vrot.lane.b32.xlu0 %v250, 127
        %v257 = vpop.permute.xlu0 %256
        %258 = vrot.lane.b32.xlu0 %v251, 127
        %v259 = vpop.permute.xlu0 %258
        %260 = vrot.lane.b32.xlu0 %v252, 127
        %v261 = vpop.permute.xlu0 %260
        %vm262 = vcmask 1039360
        %v263 = vsel %vm262, %v257, %v259
        %v264 = vsel %vm262, %v259, %v261
        %268 = vrot.lane.b32.xlu0 %v250, 126
        %v269 = vpop.permute.xlu0 %268
        %270 = vrot.lane.b32.xlu0 %v251, 126
        %v271 = vpop.permute.xlu0 %270
        %272 = vrot.lane.b32.xlu0 %v252, 126
        %v273 = vpop.permute.xlu0 %272
        %vm274 = vcmask 1031168
        %v275 = vsel %vm274, %v269, %v271
        %v276 = vsel %vm274, %v271, %v273
        %280 = vrot.lane.b32.xlu0 %v250, 110
        %v281 = vpop.permute.xlu0 %280
        %282 = vrot.lane.b32.xlu0 %v251, 110
        %v283 = vpop.permute.xlu0 %282
        %284 = vrot.lane.b32.xlu0 %v252, 110
        %v285 = vpop.permute.xlu0 %284
        %vm286 = vcmask 900096
        %v287 = vsel %vm286, %v281, %v283
        %v288 = vsel %vm286, %v283, %v285
        %292 = vrot.lane.b32.xlu0 %v250, 109
        %v293 = vpop.permute.xlu0 %292
        %294 = vrot.lane.b32.xlu0 %v251, 109
        %v295 = vpop.permute.xlu0 %294
        %296 = vrot.lane.b32.xlu0 %v252, 109
        %v297 = vpop.permute.xlu0 %296
        %vm298 = vcmask 891904
        %v299 = vsel %vm298, %v293, %v295
        %v300 = vsel %vm298, %v295, %v297
        %304 = vrot.lane.b32.xlu0 %v250, 108
        %v305 = vpop.permute.xlu0 %304
        %306 = vrot.lane.b32.xlu0 %v251, 108
        %v307 = vpop.permute.xlu0 %306
        %308 = vrot.lane.b32.xlu0 %v252, 108
        %v309 = vpop.permute.xlu0 %308
        %vm310 = vcmask 883712
        %v311 = vsel %vm310, %v305, %v307
        %v312 = vsel %vm310, %v307, %v309
        %316 = vrot.lane.b32.xlu0 %v250, 92
        %v317 = vpop.permute.xlu0 %316
        %318 = vrot.lane.b32.xlu0 %v251, 92
        %v319 = vpop.permute.xlu0 %318
        %320 = vrot.lane.b32.xlu0 %v252, 92
        %v321 = vpop.permute.xlu0 %320
        %vm322 = vcmask 752640
        %v323 = vsel %vm322, %v317, %v319
        %v324 = vsel %vm322, %v319, %v321
        %328 = vrot.lane.b32.xlu0 %v250, 91
        %v329 = vpop.permute.xlu0 %328
        %330 = vrot.lane.b32.xlu0 %v251, 91
        %v331 = vpop.permute.xlu0 %330
        %332 = vrot.lane.b32.xlu0 %v252, 91
        %v333 = vpop.permute.xlu0 %332
        %vm334 = vcmask 744448
        %v335 = vsel %vm334, %v329, %v331
        %v336 = vsel %vm334, %v331, %v333
        %340 = vrot.lane.b32.xlu0 %v250, 90
        %v341 = vpop.permute.xlu0 %340
        %342 = vrot.lane.b32.xlu0 %v251, 90
        %v343 = vpop.permute.xlu0 %342
        %344 = vrot.lane.b32.xlu0 %v252, 90
        %v345 = vpop.permute.xlu0 %344
        %vm346 = vcmask 736256
        %v347 = vsel %vm346, %v341, %v343
        %v348 = vsel %vm346, %v343, %v345
        %v352 = vld [vmem:[%s1] sm:$0xff]
        %v353 = vld [vmem:[%s1 + $0x8] sm:$0xff]
        %v354 = vld [vmem:[%s2] sm:$0xff]
        %v355 = vld [vmem:[%s2 + $0x8] sm:$0xff]
        %357 = vset.pattern.permute.xlu0 0
        %358 = vperm.xlu0 %357, %v354
        %v359 = vpop.permute.xlu0 %358
        %362 = vset.pattern.permute.xlu0 0
        %363 = vperm.xlu0 %362, %v355
        %v364 = vpop.permute.xlu0 %363
        %v368 = vunpack.c.l.b16 %v352
        %v369 = vunpack.c.h.b16 %v352
        %v370 = vunpack.c.l.b16 %v353
        %v371 = vunpack.c.h.b16 %v353
        %v372 = vpack.c.b16 %v370, %v368
        %v373 = vpack.c.b16 %v371, %v369
        %vm375 = vcmask 130048
        %v377 = vsel %vm375, %v373, 0
        %379 = vmatpush.bf16.msra.mxu0 %v335
        %380 = vmatpush.bf16.msra.mxu0 %v323
        %381 = vmatpush.bf16.msra.mxu0 %v311
        %382 = vmatpush.bf16.msra.mxu0 %v299
        %383 = vmatpush.bf16.msra.mxu0 %v287
        %384 = vmatpush.bf16.msra.mxu0 %v275
        %385 = vmatpush.bf16.msra.mxu0 %v263
        %386 = vmatpush.bf16.msra.mxu0 %v250
        %387 = vmatmul.bf16.gmra.mxu0 %v372
        %v388 = vpop.f32.mrf.mxu0
        %v389 = vadd.f32 %v359, %v388
        %v390 = vpop.f32.mrf.mxu0
        %v391 = vadd.f32 %v364, %v390
        %392 = vdwg.mxu0
        %393 = vmatpush.bf16.msra.mxu0 0
        %394 = vmatpush.bf16.msra.mxu0 0
        %395 = vmatpush.bf16.msra.mxu0 0
        %396 = vmatpush.bf16.msra.mxu0 0
        %397 = vmatpush.bf16.msra.mxu0 0
        %398 = vmatpush.bf16.msra.mxu0 0
        %399 = vmatpush.bf16.msra.mxu0 0
        %400 = vmatpush.bf16.msra.mxu0 %v347
        %401 = vmatmul.bf16.gmra.mxu0 %v377
        %v402 = vpop.f32.mrf.mxu0
        %v403 = vadd.f32 %v389, %v402
        %v404 = vpop.f32.mrf.mxu0
        %v405 = vadd.f32 %v391, %v404
        %406 = vdwg.mxu0
        %407 = vmatpush.bf16.msra.mxu0 %v336
        %408 = vmatpush.bf16.msra.mxu0 %v324
        %409 = vmatpush.bf16.msra.mxu0 %v312
        %410 = vmatpush.bf16.msra.mxu0 %v300
        %411 = vmatpush.bf16.msra.mxu0 %v288
        %412 = vmatpush.bf16.msra.mxu0 %v276
        %413 = vmatpush.bf16.msra.mxu0 %v264
        %414 = vmatpush.bf16.msra.mxu0 %v251
        %415 = vmatmul.bf16.gmra.mxu0 %v372
        %v416 = vpop.f32.mrf.mxu0
        %v417 = vadd.f32 %v359, %v416
        %v418 = vpop.f32.mrf.mxu0
        %v419 = vadd.f32 %v364, %v418
        %420 = vdwg.mxu0
        %421 = vmatpush.bf16.msra.mxu0 0
        %422 = vmatpush.bf16.msra.mxu0 0
        %423 = vmatpush.bf16.msra.mxu0 0
        %424 = vmatpush.bf16.msra.mxu0 0
        %425 = vmatpush.bf16.msra.mxu0 0
        %426 = vmatpush.bf16.msra.mxu0 0
        %427 = vmatpush.bf16.msra.mxu0 0
        %428 = vmatpush.bf16.msra.mxu0 %v348
        %429 = vmatmul.bf16.gmra.mxu0 %v377
        %v430 = vpop.f32.mrf.mxu0
        %v431 = vadd.f32 %v417, %v430
        %v432 = vpop.f32.mrf.mxu0
        %v433 = vadd.f32 %v419, %v432
        %434 = vdwg.mxu0
        %435 = vmatpush.bf16.msra.mxu0 %v333
        %436 = vmatpush.bf16.msra.mxu0 %v321
        %437 = vmatpush.bf16.msra.mxu0 %v309
        %438 = vmatpush.bf16.msra.mxu0 %v297
        %439 = vmatpush.bf16.msra.mxu0 %v285
        %440 = vmatpush.bf16.msra.mxu0 %v273
        %441 = vmatpush.bf16.msra.mxu0 %v261
        %442 = vmatpush.bf16.msra.mxu0 %v252
        %443 = vmatmul.bf16.gmra.mxu0 %v372
        %v444 = vpop.f32.mrf.mxu0
        %v445 = vadd.f32 %v359, %v444
        %v446 = vpop.f32.mrf.mxu0
        %v447 = vadd.f32 %v364, %v446
        %448 = vdwg.mxu0
        %449 = vmatpush.bf16.msra.mxu0 0
        %450 = vmatpush.bf16.msra.mxu0 0
        %451 = vmatpush.bf16.msra.mxu0 0
        %452 = vmatpush.bf16.msra.mxu0 0
        %453 = vmatpush.bf16.msra.mxu0 0
        %454 = vmatpush.bf16.msra.mxu0 0
        %455 = vmatpush.bf16.msra.mxu0 0
        %456 = vmatpush.bf16.msra.mxu0 %v345
        %457 = vmatmul.bf16.gmra.mxu0 %v377
        %v458 = vpop.f32.mrf.mxu0
        %v459 = vadd.f32 %v445, %v458
        %v460 = vpop.f32.mrf.mxu0
        %v461 = vadd.f32 %v447, %v460
        %462 = vdwg.mxu0
        %v463 = vmax.f32 %v403, 0.0
        %v464 = vmax.f32 %v431, 0.0
        %v465 = vmax.f32 %v459, 0.0
        %v466 = vmax.f32 %v405, 0.0
        %v467 = vmax.f32 %v433, 0.0
        %v468 = vmax.f32 %v461, 0.0
        %v469 = vld [vmem:[#allocation5] sm:$0x7]
        %v471 = vperm.slane %v469, 0
        %v472 = vperm.slane %v469, 1
        %v473 = vperm.slane %v469, 2
        %v477 = vmul.f32 %v463, %v471
        %v478 = vmul.f32 %v464, %v472
        %v479 = vmul.f32 %v465, %v473
        %v480 = vmul.f32 %v466, %v471
        %v481 = vmul.f32 %v467, %v472
        %v482 = vmul.f32 %v468, %v473
        %v483 = vpack.c.bf16 %v478, %v477
        %v484 = vpack.c.bf16 %v479, %v479
        %v485 = vpack.c.bf16 %v481, %v480
        %v486 = vpack.c.bf16 %v482, %v482
        %491 = vrot.lane.b32.xlu0 %v483, 19
        %v492 = vpop.permute.xlu0 %491
        %493 = vrot.lane.b32.xlu0 %v484, 19
        %v494 = vpop.permute.xlu0 %493
        %495 = vrot.lane.b32.xlu0 %v485, 19
        %v496 = vpop.permute.xlu0 %495
        %497 = vrot.lane.b32.xlu0 %v486, 19
        %v498 = vpop.permute.xlu0 %497
        %v499 = vrot.slane %v492, 4
        %v500 = vrot.slane %v496, 4
        %vm501 = vcmask 154624
        %v502 = vsel %vm501, %v499, %v492
        %v503 = vsel %vm501, %v499, %v494
        %v504 = vsel %vm501, %v500, %v496
        %v505 = vsel %vm501, %v500, %v498
        %vm510 = vcmask 1043608
        %vm511 = vcmask 1047556
        %vm512 = vmor %vm511, %vm510
        %513 = vst.msk [vmem:[%s232] sm:$0xff] %vm512, %v502
        %vm514 = vcmask 887808
        %515 = vst.msk [vmem:[%s232 + $0x8] sm:$0xf] %vm514, %v503
        %516 = vst.msk [vmem:[%s232 + $0xc] sm:$0xff] %vm512, %v504
        %517 = vst.msk [vmem:[%s232 + $0x14] sm:$0xf] %vm514, %v505
        %vm518 = vcmask 150528
        %519 = vst.msk [vmem:[%s232] sm:$0xf] %vm518, 0
        %520 = vst.msk [vmem:[%s232 + $0xc] sm:$0xf] %vm518, 0
        %vm521 = vcmask 1044328
        %522 = vst.msk [vmem:[%s232 + $0x8] sm:$0xf] %vm521, 0
        %523 = vst.msk [vmem:[%s232 + $0x14] sm:$0xf] %vm521, 0
        %s524 = sand.u32 %s119, 1
        %s525 = scalar_lea.sflag [#allocation4], %s524
        %s526 = sand.u32 %s119, 1
        %s527 = smul.addr %s526, 24
        %s528 = scalar_lea.vmem [#allocation7], %s527
        // Predicated region
        $region45: #{tpu_custom_call.1} parent=35 // pred_check
          %p529 = pneg %p129
        $region46: #{tpu_custom_call.1} parent=35 // pred_check_branch
          %531 = sbr.rel (%p529) target = $region48
        $region47: #{tpu_custom_call.1} parent=35 // pred_region
          %s532 = smul.u32 3, %s22
          %534 = vsyncadd %s525, 0
          %s535 = smul.addr %s532, 4
          %s536 = scalar_lea.hbm %s4, %s535
          %s537 = sshll.u32 %s528, 4
          %s538 = int_to_ptr.vmem [resolvable:$true] %s537
          %s539 = sshll.u32 %s536, 4
          %s540 = int_to_ptr.hbm [resolvable:$true] %s539
          %545 = dma.vmem_to_hbm [thread:$0]  %s538, 384, %s540, %s525, 192, 384, 12
        $region48: #{tpu_custom_call.1} parent=35 // pred_fallthru
          _
      $region36: #{tpu_custom_call.1} parent=5 // pred_fallthru
        _
      %p546 = scmp.le.s32.totalorder 2, %s17
      // Predicated region
      $region49: #{tpu_custom_call.1} parent=5 // pred_check
        %p547 = pneg %p546
      $region50: #{tpu_custom_call.1} parent=5 // pred_check_branch
        %549 = sbr.rel (%p547) target = $region52
      $region51: #{tpu_custom_call.1} parent=5 // pred_region
        %s550 = ssub.s32 %s17, 2
        // Predicated region
        $region53: #{tpu_custom_call.1} parent=51 // pred_check
          %p551 = pneg %p135
        $region54: #{tpu_custom_call.1} parent=51 // pred_check_branch
          %553 = sbr.rel (%p551) target = $region56
        $region55: #{tpu_custom_call.1} parent=51 // pred_region
          %s554 = sand.u32 %s120, 1
          %s555 = scalar_lea.sflag [#allocation4], %s554
          %s556 = sand.u32 %s120, 1
          %s557 = smul.addr %s556, 24
          %s558 = scalar_lea.vmem [#allocation7], %s557
          %560 = dma.done %s555, 384
        $region56: #{tpu_custom_call.1} parent=51 // pred_fallthru
          _
      $region52: #{tpu_custom_call.1} parent=5 // pred_fallthru
        _
    $region6: #{tpu_custom_call.1} parent=1 // loop_footer
      %s21 = sadd.s32 1, %s17
    $region7: #{tpu_custom_call.1} parent=1 // loop_footer_branch
      %16 = sbr.rel target = $region3
    $region8: #{tpu_custom_call.1} parent=1 // loop_exit
      _
    %561 = vsyncpa [#allocation3], 1
    %s562 = scalar_lea.sflag [#allocation3], 1
    %563 = vsyncpa %s562, 1
    %564 = vsyncpa [#allocation6], 1
    %565 = vsyncpa [#allocation4], 1
    %s566 = scalar_lea.sflag [#allocation4], 1
    %567 = vsyncpa %s566, 1

</llo_original>
